<compile_context>
chip_gen: v5e
topology: v5e:2x2
jax: 0.10.0
libtpu: 0.0.40
codegen_flags: <defaults>
</compile_context>

<pallas_src>
import math

import jax
import jax.numpy as jnp
from jax.experimental import pallas as pl
from jax.experimental.pallas import tpu as pltpu


def _scale_geometry(H, W, scale_list):
    """Static per-scale pooling geometry (mirrors the PyTorch module)."""
    info = []
    for s in scale_list:
        h_wid = int(math.ceil(H / s))
        w_wid = int(math.ceil(W / s))
        # NOTE: the PyTorch reference computes a *float* padding and hands it to
        # nn.MaxPool2d; we truncate to int (standard SPP practice).  For divisible
        # H/W (as tested here) the padding is 0, so this is exact.
        # TODO(synk): revisit float-padding semantics for non-divisible H/W inputs.
        h_pad = int((h_wid * s - H + 1) / 2)
        w_pad = int((w_wid * s - W + 1) / 2)
        out_h = (H + 2 * h_pad - h_wid) // h_wid + 1
        out_w = (W + 2 * w_pad - w_wid) // w_wid + 1
        # Static sanity: no window may become empty after clamping to the image
        # (clamping == reduce_window's -inf padding only while pad < window).
        assert 0 <= h_pad < h_wid and 0 <= w_pad < w_wid, (s, h_wid, h_pad, w_wid, w_pad)
        assert (out_h - 1) * h_wid - h_pad < H and (out_w - 1) * w_wid - w_pad < W
        info.append((h_wid, w_wid, h_pad, w_pad, out_h, out_w))
    return tuple(info)


def _build_plan(scale_info, H, W):
    """Per scale: pool from the image, or reuse an already-pooled finer scale.

    Returns [(scale_idx, src)] in finest-first order, where src is None (pool
    directly from the input block) or (finer_idx, rh, rw) meaning each of this
    scale's windows covers exactly an rh x rw block of the finer scale's cells.
    """
    order = sorted(range(len(scale_info)),
                   key=lambda k: -(scale_info[k][4] * scale_info[k][5]))
    plan, computed = [], []
    for idx in order:
        h_wid, w_wid, h_pad, w_pad, _, _ = scale_info[idx]
        src = None
        if h_pad == 0 and w_pad == 0 and H % h_wid == 0 and W % w_wid == 0:
            for fidx in computed:
                fh, fw, fhp, fwp, _, _ = scale_info[fidx]
                if (fhp == 0 and fwp == 0 and H % fh == 0 and W % fw == 0
                        and h_wid % fh == 0 and w_wid % fw == 0):
                    src = (fidx, h_wid // fh, w_wid // fw)
                    break
        plan.append((idx, src))
        computed.append(idx)
    return plan


def _pool_plane(get_row, Hs, Ws, h_wid, w_wid, h_pad, w_pad, oh, ow):
    """Max-pool a (Ct, Hs, Ws) source given a row loader get_row(r) -> (Ct, 1, Ws).

    H-window: unrolled elementwise maxima across the window's rows (VPU only).
    W-window: one contiguous-slab lane reduction per output column.
    Bands are finalized immediately, so live vreg values stay ~one band.
    """
    out_rows = []
    for i in range(oh):
        h0 = max(i * h_wid - h_pad, 0)
        h1 = min(i * h_wid - h_pad + h_wid, Hs)
        band = get_row(h0)                                     # (Ct, 1, Ws)
        for r in range(h0 + 1, h1):
            band = jnp.maximum(band, get_row(r))               # VPU elementwise max
        cols = []
        for j in range(ow):
            w0 = max(j * w_wid - w_pad, 0)
            w1 = min(j * w_wid - w_pad + w_wid, Ws)
            cols.append(jnp.max(band[:, :, w0:w1], axis=2, keepdims=True))  # (Ct,1,1)
        out_rows.append(cols[0] if ow == 1 else jnp.concatenate(cols, axis=2))
    return out_rows[0] if oh == 1 else jnp.concatenate(out_rows, axis=1)     # (Ct,oh,ow)


def _make_spp_kernel(scale_info, plan, H, W):
    """One (batch, channel-tile) block per grid step; all pyramid scales fused."""

    def kernel(x_ref, *out_refs):
        # x_ref block: (1, Ct, H, W) -- channels leading, H on sublanes, W on lanes.
        pooled = {}
        for idx, src in plan:
            h_wid, w_wid, h_pad, w_pad, oh, ow = scale_info[idx]
            if src is None:
                # Pool straight from the input block (single sweep over the image).
                cur = _pool_plane(lambda r: x_ref[0, :, r:r + 1, :],
                                  H, W, h_wid, w_wid, h_pad, w_pad, oh, ow)
            else:
                # Derive this coarser scale from the already-pooled finer cells.
                fidx, rh, rw = src
                fine = pooled[fidx]                             # (Ct, foh, fow)
                foh, fow = scale_info[fidx][4], scale_info[fidx][5]
                cur = _pool_plane(lambda r: fine[:, r:r + 1, :],
                                  foh, fow, rh, rw, 0, 0, oh, ow)
            pooled[idx] = cur
            out_refs[idx][0] = cur.astype(out_refs[idx].dtype)  # (Ct, oh, ow) slab

    return kernel


def _pick_channel_tile(C, H, W, itemsize, budget_bytes=6 * 1024 * 1024):
    """Largest divisor of C whose (Ct, H, W) block fits ~budget (single buffer),
    so the double-buffered block stays under v5e's 16 MiB default scoped VMEM and
    well under v7x's 64 MiB physical VMEM."""
    per_channel = max(1, H * W * itemsize)
    ct = max(1, min(C, budget_bytes // per_channel))
    while C % ct != 0:
        ct -= 1
    return ct


def spp_layer(x, scale_list):
    """Pallas implementation of SPPLayer.forward.  x is NCHW; output matches the
    torch flatten order ([scale][channel][row][col])."""
    B, C, H, W = x.shape
    scale_info = _scale_geometry(H, W, scale_list)
    plan = _build_plan(scale_info, H, W)

    itemsize = jnp.dtype(x.dtype).itemsize
    Ct = _pick_channel_tile(C, H, W, itemsize)
    num_ct = C // Ct

    out_shapes = tuple(
        jax.ShapeDtypeStruct((B, C, oh, ow), x.dtype)
        for (_, _, _, _, oh, ow) in scale_info
    )
    out_specs = tuple(
        pl.BlockSpec((1, Ct, oh, ow), lambda b, c: (b, c, 0, 0))
        for (_, _, _, _, oh, ow) in scale_info
    )

    in_bytes = B * C * H * W * itemsize
    out_bytes = sum(B * C * oh * ow * itemsize for (_, _, _, _, oh, ow) in scale_info)
    in_block_bytes = Ct * H * W * itemsize
    out_block_bytes = sum(Ct * oh * ow * itemsize for (_, _, _, _, oh, ow) in scale_info)
    vmem_need = 2 * (in_block_bytes + out_block_bytes) + (1 << 20)
    vmem_limit = int(min(64 << 20, max(vmem_need, 32 << 20)))

    outs = pl.pallas_call(
        _make_spp_kernel(scale_info, plan, H, W),
        out_shape=out_shapes,
        grid=(B, num_ct),
        in_specs=[pl.BlockSpec((1, Ct, H, W), lambda b, c: (b, c, 0, 0))],
        out_specs=out_specs,
        compiler_params=pltpu.CompilerParams(
            dimension_semantics=("parallel", "parallel"),
            vmem_limit_bytes=vmem_limit,
        ),
        cost_estimate=pl.CostEstimate(
            flops=2 * B * C * H * W,          # ~one pass of maxima over the image
            transcendentals=0,
            bytes_accessed=in_bytes + out_bytes,
        ),
    )(x)

    # Exactly torch's per-scale out.view(B, -1) followed by torch.cat: a free
    # row-major reshape of each tiny pooled tensor plus a tiny concat.
    return jnp.concatenate([o.reshape(B, -1) for o in outs], axis=1)


def spp_reference(x, scale_list):
    """Pure-JAX reference mirroring the PyTorch forward."""
    B, C, H, W = x.shape
    scale_info = _scale_geometry(H, W, scale_list)
    parts = []
    for (h_wid, w_wid, h_pad, w_pad, _, _) in scale_info:
        out = jax.lax.reduce_window(
            x,
            -jnp.inf,
            jax.lax.max,
            window_dimensions=(1, 1, h_wid, w_wid),
            window_strides=(1, 1, h_wid, w_wid),
            padding=((0, 0), (0, 0), (h_pad, h_pad), (w_pad, w_pad)),
        )
        parts.append(out.reshape(B, -1))
    return jnp.concatenate(parts, axis=1)


if __name__ == "__main__":
    key = jax.random.PRNGKey(0)
    B, C, H, W = 2, 4, 16, 16
    x = jax.random.normal(key, (B, C, H, W), dtype=jnp.float32)
    scale_list = [1, 2, 4]  # SPP pyramid levels (no learnable parameters)

    out = jax.block_until_ready(spp_layer(x, scale_list))
    ref = spp_reference(x, scale_list)

    assert out.shape == (B, C * sum(s * s for s in scale_list)), out.shape
    assert jnp.allclose(out, ref), "Pallas SPP output mismatch vs reference"

    print("KERNEL_OK")
</pallas_src>

<mosaic_0001>
module attributes {stable_mosaic.version = 11 : i64} {
  func.func @kernel(%arg0: i32, %arg1: i32, %arg2: memref<1x4x16x16xf32, #tpu.memory_space<vmem>>, %arg3: memref<1x4x1x1xf32, #tpu.memory_space<vmem>>, %arg4: memref<1x4x2x2xf32, #tpu.memory_space<vmem>>, %arg5: memref<1x4x4x4xf32, #tpu.memory_space<vmem>>) attributes {dimension_semantics = [#tpu.dimension_semantics<parallel>, #tpu.dimension_semantics<parallel>], iteration_bounds = array<i64: 2, 1>, scalar_prefetch = 0 : i64, scratch_operands = 0 : i64, tpu.core_type = #tpu.core_type<tc>, window_params = [{transform_indices = @transform_0, window_bounds = array<i64: 1, 4, 16, 16>}, {transform_indices = @transform_1, window_bounds = array<i64: 1, 4, 1, 1>}, {transform_indices = @transform_2, window_bounds = array<i64: 1, 4, 2, 2>}, {transform_indices = @transform_3, window_bounds = array<i64: 1, 4, 4, 4>}]} {
    %c0 = arith.constant 0 : index
    %c0_0 = arith.constant 0 : index
    %c0_1 = arith.constant 0 : index
    %c0_2 = arith.constant 0 : index
    %0 = vector.load %arg2[%c0, %c0_0, %c0_1, %c0_2] : memref<1x4x16x16xf32, #tpu.memory_space<vmem>>, vector<1x4x1x16xf32>
    %1 = vector.shape_cast %0 : vector<1x4x1x16xf32> to vector<4x1x16xf32>
    %c0_3 = arith.constant 0 : index
    %c0_4 = arith.constant 0 : index
    %c1 = arith.constant 1 : index
    %c0_5 = arith.constant 0 : index
    %2 = vector.load %arg2[%c0_3, %c0_4, %c1, %c0_5] : memref<1x4x16x16xf32, #tpu.memory_space<vmem>>, vector<1x4x1x16xf32>
    %3 = vector.shape_cast %2 : vector<1x4x1x16xf32> to vector<4x1x16xf32>
    %4 = arith.maximumf %1, %3 : vector<4x1x16xf32>
    %c0_6 = arith.constant 0 : index
    %c0_7 = arith.constant 0 : index
    %c2 = arith.constant 2 : index
    %c0_8 = arith.constant 0 : index
    %5 = vector.load %arg2[%c0_6, %c0_7, %c2, %c0_8] : memref<1x4x16x16xf32, #tpu.memory_space<vmem>>, vector<1x4x1x16xf32>
    %6 = vector.shape_cast %5 : vector<1x4x1x16xf32> to vector<4x1x16xf32>
    %7 = arith.maximumf %4, %6 : vector<4x1x16xf32>
    %c0_9 = arith.constant 0 : index
    %c0_10 = arith.constant 0 : index
    %c3 = arith.constant 3 : index
    %c0_11 = arith.constant 0 : index
    %8 = vector.load %arg2[%c0_9, %c0_10, %c3, %c0_11] : memref<1x4x16x16xf32, #tpu.memory_space<vmem>>, vector<1x4x1x16xf32>
    %9 = vector.shape_cast %8 : vector<1x4x1x16xf32> to vector<4x1x16xf32>
    %10 = arith.maximumf %7, %9 : vector<4x1x16xf32>
    %11 = vector.extract_strided_slice %10 {offsets = [0, 0, 0], sizes = [4, 1, 4], strides = [1, 1, 1]} : vector<4x1x16xf32> to vector<4x1x4xf32>
    %cst = arith.constant dense<0xFF800000> : vector<4x1xf32>
    %12 = vector.multi_reduction <maximumf>, %11, %cst [2] : vector<4x1x4xf32> to vector<4x1xf32>
    %13 = vector.shape_cast %12 : vector<4x1xf32> to vector<4x1x1xf32>
    %14 = vector.extract_strided_slice %10 {offsets = [0, 0, 4], sizes = [4, 1, 4], strides = [1, 1, 1]} : vector<4x1x16xf32> to vector<4x1x4xf32>
    %cst_12 = arith.constant dense<0xFF800000> : vector<4x1xf32>
    %15 = vector.multi_reduction <maximumf>, %14, %cst_12 [2] : vector<4x1x4xf32> to vector<4x1xf32>
    %16 = vector.shape_cast %15 : vector<4x1xf32> to vector<4x1x1xf32>
    %17 = vector.extract_strided_slice %10 {offsets = [0, 0, 8], sizes = [4, 1, 4], strides = [1, 1, 1]} : vector<4x1x16xf32> to vector<4x1x4xf32>
    %cst_13 = arith.constant dense<0xFF800000> : vector<4x1xf32>
    %18 = vector.multi_reduction <maximumf>, %17, %cst_13 [2] : vector<4x1x4xf32> to vector<4x1xf32>
    %19 = vector.shape_cast %18 : vector<4x1xf32> to vector<4x1x1xf32>
    %20 = vector.extract_strided_slice %10 {offsets = [0, 0, 12], sizes = [4, 1, 4], strides = [1, 1, 1]} : vector<4x1x16xf32> to vector<4x1x4xf32>
    %cst_14 = arith.constant dense<0xFF800000> : vector<4x1xf32>
    %21 = vector.multi_reduction <maximumf>, %20, %cst_14 [2] : vector<4x1x4xf32> to vector<4x1xf32>
    %22 = vector.shape_cast %21 : vector<4x1xf32> to vector<4x1x1xf32>
    %23 = tpu.concatenate %13, %16, %19, %22 in 2 : vector<4x1x1xf32>, vector<4x1x1xf32>, vector<4x1x1xf32>, vector<4x1x1xf32> -> vector<4x1x4xf32>
    %c0_15 = arith.constant 0 : index
    %c0_16 = arith.constant 0 : index
    %c4 = arith.constant 4 : index
    %c0_17 = arith.constant 0 : index
    %24 = vector.load %arg2[%c0_15, %c0_16, %c4, %c0_17] : memref<1x4x16x16xf32, #tpu.memory_space<vmem>>, vector<1x4x1x16xf32>
    %25 = vector.shape_cast %24 : vector<1x4x1x16xf32> to vector<4x1x16xf32>
    %c0_18 = arith.constant 0 : index
    %c0_19 = arith.constant 0 : index
    %c5 = arith.constant 5 : index
    %c0_20 = arith.constant 0 : index
    %26 = vector.load %arg2[%c0_18, %c0_19, %c5, %c0_20] : memref<1x4x16x16xf32, #tpu.memory_space<vmem>>, vector<1x4x1x16xf32>
    %27 = vector.shape_cast %26 : vector<1x4x1x16xf32> to vector<4x1x16xf32>
    %28 = arith.maximumf %25, %27 : vector<4x1x16xf32>
    %c0_21 = arith.constant 0 : index
    %c0_22 = arith.constant 0 : index
    %c6 = arith.constant 6 : index
    %c0_23 = arith.constant 0 : index
    %29 = vector.load %arg2[%c0_21, %c0_22, %c6, %c0_23] : memref<1x4x16x16xf32, #tpu.memory_space<vmem>>, vector<1x4x1x16xf32>
    %30 = vector.shape_cast %29 : vector<1x4x1x16xf32> to vector<4x1x16xf32>
    %31 = arith.maximumf %28, %30 : vector<4x1x16xf32>
    %c0_24 = arith.constant 0 : index
    %c0_25 = arith.constant 0 : index
    %c7 = arith.constant 7 : index
    %c0_26 = arith.constant 0 : index
    %32 = vector.load %arg2[%c0_24, %c0_25, %c7, %c0_26] : memref<1x4x16x16xf32, #tpu.memory_space<vmem>>, vector<1x4x1x16xf32>
    %33 = vector.shape_cast %32 : vector<1x4x1x16xf32> to vector<4x1x16xf32>
    %34 = arith.maximumf %31, %33 : vector<4x1x16xf32>
    %35 = vector.extract_strided_slice %34 {offsets = [0, 0, 0], sizes = [4, 1, 4], strides = [1, 1, 1]} : vector<4x1x16xf32> to vector<4x1x4xf32>
    %cst_27 = arith.constant dense<0xFF800000> : vector<4x1xf32>
    %36 = vector.multi_reduction <maximumf>, %35, %cst_27 [2] : vector<4x1x4xf32> to vector<4x1xf32>
    %37 = vector.shape_cast %36 : vector<4x1xf32> to vector<4x1x1xf32>
    %38 = vector.extract_strided_slice %34 {offsets = [0, 0, 4], sizes = [4, 1, 4], strides = [1, 1, 1]} : vector<4x1x16xf32> to vector<4x1x4xf32>
    %cst_28 = arith.constant dense<0xFF800000> : vector<4x1xf32>
    %39 = vector.multi_reduction <maximumf>, %38, %cst_28 [2] : vector<4x1x4xf32> to vector<4x1xf32>
    %40 = vector.shape_cast %39 : vector<4x1xf32> to vector<4x1x1xf32>
    %41 = vector.extract_strided_slice %34 {offsets = [0, 0, 8], sizes = [4, 1, 4], strides = [1, 1, 1]} : vector<4x1x16xf32> to vector<4x1x4xf32>
    %cst_29 = arith.constant dense<0xFF800000> : vector<4x1xf32>
    %42 = vector.multi_reduction <maximumf>, %41, %cst_29 [2] : vector<4x1x4xf32> to vector<4x1xf32>
    %43 = vector.shape_cast %42 : vector<4x1xf32> to vector<4x1x1xf32>
    %44 = vector.extract_strided_slice %34 {offsets = [0, 0, 12], sizes = [4, 1, 4], strides = [1, 1, 1]} : vector<4x1x16xf32> to vector<4x1x4xf32>
    %cst_30 = arith.constant dense<0xFF800000> : vector<4x1xf32>
    %45 = vector.multi_reduction <maximumf>, %44, %cst_30 [2] : vector<4x1x4xf32> to vector<4x1xf32>
    %46 = vector.shape_cast %45 : vector<4x1xf32> to vector<4x1x1xf32>
    %47 = tpu.concatenate %37, %40, %43, %46 in 2 : vector<4x1x1xf32>, vector<4x1x1xf32>, vector<4x1x1xf32>, vector<4x1x1xf32> -> vector<4x1x4xf32>
    %c0_31 = arith.constant 0 : index
    %c0_32 = arith.constant 0 : index
    %c8 = arith.constant 8 : index
    %c0_33 = arith.constant 0 : index
    %48 = vector.load %arg2[%c0_31, %c0_32, %c8, %c0_33] : memref<1x4x16x16xf32, #tpu.memory_space<vmem>>, vector<1x4x1x16xf32>
    %49 = vector.shape_cast %48 : vector<1x4x1x16xf32> to vector<4x1x16xf32>
    %c0_34 = arith.constant 0 : index
    %c0_35 = arith.constant 0 : index
    %c9 = arith.constant 9 : index
    %c0_36 = arith.constant 0 : index
    %50 = vector.load %arg2[%c0_34, %c0_35, %c9, %c0_36] : memref<1x4x16x16xf32, #tpu.memory_space<vmem>>, vector<1x4x1x16xf32>
    %51 = vector.shape_cast %50 : vector<1x4x1x16xf32> to vector<4x1x16xf32>
    %52 = arith.maximumf %49, %51 : vector<4x1x16xf32>
    %c0_37 = arith.constant 0 : index
    %c0_38 = arith.constant 0 : index
    %c10 = arith.constant 10 : index
    %c0_39 = arith.constant 0 : index
    %53 = vector.load %arg2[%c0_37, %c0_38, %c10, %c0_39] : memref<1x4x16x16xf32, #tpu.memory_space<vmem>>, vector<1x4x1x16xf32>
    %54 = vector.shape_cast %53 : vector<1x4x1x16xf32> to vector<4x1x16xf32>
    %55 = arith.maximumf %52, %54 : vector<4x1x16xf32>
    %c0_40 = arith.constant 0 : index
    %c0_41 = arith.constant 0 : index
    %c11 = arith.constant 11 : index
    %c0_42 = arith.constant 0 : index
    %56 = vector.load %arg2[%c0_40, %c0_41, %c11, %c0_42] : memref<1x4x16x16xf32, #tpu.memory_space<vmem>>, vector<1x4x1x16xf32>
    %57 = vector.shape_cast %56 : vector<1x4x1x16xf32> to vector<4x1x16xf32>
    %58 = arith.maximumf %55, %57 : vector<4x1x16xf32>
    %59 = vector.extract_strided_slice %58 {offsets = [0, 0, 0], sizes = [4, 1, 4], strides = [1, 1, 1]} : vector<4x1x16xf32> to vector<4x1x4xf32>
    %cst_43 = arith.constant dense<0xFF800000> : vector<4x1xf32>
    %60 = vector.multi_reduction <maximumf>, %59, %cst_43 [2] : vector<4x1x4xf32> to vector<4x1xf32>
    %61 = vector.shape_cast %60 : vector<4x1xf32> to vector<4x1x1xf32>
    %62 = vector.extract_strided_slice %58 {offsets = [0, 0, 4], sizes = [4, 1, 4], strides = [1, 1, 1]} : vector<4x1x16xf32> to vector<4x1x4xf32>
    %cst_44 = arith.constant dense<0xFF800000> : vector<4x1xf32>
    %63 = vector.multi_reduction <maximumf>, %62, %cst_44 [2] : vector<4x1x4xf32> to vector<4x1xf32>
    %64 = vector.shape_cast %63 : vector<4x1xf32> to vector<4x1x1xf32>
    %65 = vector.extract_strided_slice %58 {offsets = [0, 0, 8], sizes = [4, 1, 4], strides = [1, 1, 1]} : vector<4x1x16xf32> to vector<4x1x4xf32>
    %cst_45 = arith.constant dense<0xFF800000> : vector<4x1xf32>
    %66 = vector.multi_reduction <maximumf>, %65, %cst_45 [2] : vector<4x1x4xf32> to vector<4x1xf32>
    %67 = vector.shape_cast %66 : vector<4x1xf32> to vector<4x1x1xf32>
    %68 = vector.extract_strided_slice %58 {offsets = [0, 0, 12], sizes = [4, 1, 4], strides = [1, 1, 1]} : vector<4x1x16xf32> to vector<4x1x4xf32>
    %cst_46 = arith.constant dense<0xFF800000> : vector<4x1xf32>
    %69 = vector.multi_reduction <maximumf>, %68, %cst_46 [2] : vector<4x1x4xf32> to vector<4x1xf32>
    %70 = vector.shape_cast %69 : vector<4x1xf32> to vector<4x1x1xf32>
    %71 = tpu.concatenate %61, %64, %67, %70 in 2 : vector<4x1x1xf32>, vector<4x1x1xf32>, vector<4x1x1xf32>, vector<4x1x1xf32> -> vector<4x1x4xf32>
    %c0_47 = arith.constant 0 : index
    %c0_48 = arith.constant 0 : index
    %c12 = arith.constant 12 : index
    %c0_49 = arith.constant 0 : index
    %72 = vector.load %arg2[%c0_47, %c0_48, %c12, %c0_49] : memref<1x4x16x16xf32, #tpu.memory_space<vmem>>, vector<1x4x1x16xf32>
    %73 = vector.shape_cast %72 : vector<1x4x1x16xf32> to vector<4x1x16xf32>
    %c0_50 = arith.constant 0 : index
    %c0_51 = arith.constant 0 : index
    %c13 = arith.constant 13 : index
    %c0_52 = arith.constant 0 : index
    %74 = vector.load %arg2[%c0_50, %c0_51, %c13, %c0_52] : memref<1x4x16x16xf32, #tpu.memory_space<vmem>>, vector<1x4x1x16xf32>
    %75 = vector.shape_cast %74 : vector<1x4x1x16xf32> to vector<4x1x16xf32>
    %76 = arith.maximumf %73, %75 : vector<4x1x16xf32>
    %c0_53 = arith.constant 0 : index
    %c0_54 = arith.constant 0 : index
    %c14 = arith.constant 14 : index
    %c0_55 = arith.constant 0 : index
    %77 = vector.load %arg2[%c0_53, %c0_54, %c14, %c0_55] : memref<1x4x16x16xf32, #tpu.memory_space<vmem>>, vector<1x4x1x16xf32>
    %78 = vector.shape_cast %77 : vector<1x4x1x16xf32> to vector<4x1x16xf32>
    %79 = arith.maximumf %76, %78 : vector<4x1x16xf32>
    %c0_56 = arith.constant 0 : index
    %c0_57 = arith.constant 0 : index
    %c15 = arith.constant 15 : index
    %c0_58 = arith.constant 0 : index
    %80 = vector.load %arg2[%c0_56, %c0_57, %c15, %c0_58] : memref<1x4x16x16xf32, #tpu.memory_space<vmem>>, vector<1x4x1x16xf32>
    %81 = vector.shape_cast %80 : vector<1x4x1x16xf32> to vector<4x1x16xf32>
    %82 = arith.maximumf %79, %81 : vector<4x1x16xf32>
    %83 = vector.extract_strided_slice %82 {offsets = [0, 0, 0], sizes = [4, 1, 4], strides = [1, 1, 1]} : vector<4x1x16xf32> to vector<4x1x4xf32>
    %cst_59 = arith.constant dense<0xFF800000> : vector<4x1xf32>
    %84 = vector.multi_reduction <maximumf>, %83, %cst_59 [2] : vector<4x1x4xf32> to vector<4x1xf32>
    %85 = vector.shape_cast %84 : vector<4x1xf32> to vector<4x1x1xf32>
    %86 = vector.extract_strided_slice %82 {offsets = [0, 0, 4], sizes = [4, 1, 4], strides = [1, 1, 1]} : vector<4x1x16xf32> to vector<4x1x4xf32>
    %cst_60 = arith.constant dense<0xFF800000> : vector<4x1xf32>
    %87 = vector.multi_reduction <maximumf>, %86, %cst_60 [2] : vector<4x1x4xf32> to vector<4x1xf32>
    %88 = vector.shape_cast %87 : vector<4x1xf32> to vector<4x1x1xf32>
    %89 = vector.extract_strided_slice %82 {offsets = [0, 0, 8], sizes = [4, 1, 4], strides = [1, 1, 1]} : vector<4x1x16xf32> to vector<4x1x4xf32>
    %cst_61 = arith.constant dense<0xFF800000> : vector<4x1xf32>
    %90 = vector.multi_reduction <maximumf>, %89, %cst_61 [2] : vector<4x1x4xf32> to vector<4x1xf32>
    %91 = vector.shape_cast %90 : vector<4x1xf32> to vector<4x1x1xf32>
    %92 = vector.extract_strided_slice %82 {offsets = [0, 0, 12], sizes = [4, 1, 4], strides = [1, 1, 1]} : vector<4x1x16xf32> to vector<4x1x4xf32>
    %cst_62 = arith.constant dense<0xFF800000> : vector<4x1xf32>
    %93 = vector.multi_reduction <maximumf>, %92, %cst_62 [2] : vector<4x1x4xf32> to vector<4x1xf32>
    %94 = vector.shape_cast %93 : vector<4x1xf32> to vector<4x1x1xf32>
    %95 = tpu.concatenate %85, %88, %91, %94 in 2 : vector<4x1x1xf32>, vector<4x1x1xf32>, vector<4x1x1xf32>, vector<4x1x1xf32> -> vector<4x1x4xf32>
    %96 = tpu.concatenate %23, %47, %71, %95 in 1 : vector<4x1x4xf32>, vector<4x1x4xf32>, vector<4x1x4xf32>, vector<4x1x4xf32> -> vector<4x4x4xf32>
    %c0_63 = arith.constant 0 : index
    %c0_64 = arith.constant 0 : index
    %c0_65 = arith.constant 0 : index
    %c0_66 = arith.constant 0 : index
    %97 = vector.load %arg5[%c0_63, %c0_64, %c0_65, %c0_66] : memref<1x4x4x4xf32, #tpu.memory_space<vmem>>, vector<1x4x4x4xf32>
    %98 = vector.shape_cast %97 : vector<1x4x4x4xf32> to vector<4x4x4xf32>
    %99 = vector.shape_cast %96 : vector<4x4x4xf32> to vector<1x4x4x4xf32>
    tpu.vector_store %arg5[%c0_63, %c0_64, %c0_65, %c0_66], %99 {strides = array<i32>} : memref<1x4x4x4xf32, #tpu.memory_space<vmem>>, vector<1x4x4x4xf32>,
    %100 = vector.extract_strided_slice %96 {offsets = [0, 0, 0], sizes = [4, 1, 4], strides = [1, 1, 1]} : vector<4x4x4xf32> to vector<4x1x4xf32>
    %101 = vector.extract_strided_slice %96 {offsets = [0, 1, 0], sizes = [4, 1, 4], strides = [1, 1, 1]} : vector<4x4x4xf32> to vector<4x1x4xf32>
    %102 = arith.maximumf %100, %101 : vector<4x1x4xf32>
    %103 = vector.extract_strided_slice %102 {offsets = [0, 0, 0], sizes = [4, 1, 2], strides = [1, 1, 1]} : vector<4x1x4xf32> to vector<4x1x2xf32>
    %cst_67 = arith.constant dense<0xFF800000> : vector<4x1xf32>
    %104 = vector.multi_reduction <maximumf>, %103, %cst_67 [2] : vector<4x1x2xf32> to vector<4x1xf32>
    %105 = vector.shape_cast %104 : vector<4x1xf32> to vector<4x1x1xf32>
    %106 = vector.extract_strided_slice %102 {offsets = [0, 0, 2], sizes = [4, 1, 2], strides = [1, 1, 1]} : vector<4x1x4xf32> to vector<4x1x2xf32>
    %cst_68 = arith.constant dense<0xFF800000> : vector<4x1xf32>
    %107 = vector.multi_reduction <maximumf>, %106, %cst_68 [2] : vector<4x1x2xf32> to vector<4x1xf32>
    %108 = vector.shape_cast %107 : vector<4x1xf32> to vector<4x1x1xf32>
    %109 = tpu.concatenate %105, %108 in 2 : vector<4x1x1xf32>, vector<4x1x1xf32> -> vector<4x1x2xf32>
    %110 = vector.extract_strided_slice %96 {offsets = [0, 2, 0], sizes = [4, 1, 4], strides = [1, 1, 1]} : vector<4x4x4xf32> to vector<4x1x4xf32>
    %111 = vector.extract_strided_slice %96 {offsets = [0, 3, 0], sizes = [4, 1, 4], strides = [1, 1, 1]} : vector<4x4x4xf32> to vector<4x1x4xf32>
    %112 = arith.maximumf %110, %111 : vector<4x1x4xf32>
    %113 = vector.extract_strided_slice %112 {offsets = [0, 0, 0], sizes = [4, 1, 2], strides = [1, 1, 1]} : vector<4x1x4xf32> to vector<4x1x2xf32>
    %cst_69 = arith.constant dense<0xFF800000> : vector<4x1xf32>
    %114 = vector.multi_reduction <maximumf>, %113, %cst_69 [2] : vector<4x1x2xf32> to vector<4x1xf32>
    %115 = vector.shape_cast %114 : vector<4x1xf32> to vector<4x1x1xf32>
    %116 = vector.extract_strided_slice %112 {offsets = [0, 0, 2], sizes = [4, 1, 2], strides = [1, 1, 1]} : vector<4x1x4xf32> to vector<4x1x2xf32>
    %cst_70 = arith.constant dense<0xFF800000> : vector<4x1xf32>
    %117 = vector.multi_reduction <maximumf>, %116, %cst_70 [2] : vector<4x1x2xf32> to vector<4x1xf32>
    %118 = vector.shape_cast %117 : vector<4x1xf32> to vector<4x1x1xf32>
    %119 = tpu.concatenate %115, %118 in 2 : vector<4x1x1xf32>, vector<4x1x1xf32> -> vector<4x1x2xf32>
    %120 = tpu.concatenate %109, %119 in 1 : vector<4x1x2xf32>, vector<4x1x2xf32> -> vector<4x2x2xf32>
    %c0_71 = arith.constant 0 : index
    %c0_72 = arith.constant 0 : index
    %c0_73 = arith.constant 0 : index
    %c0_74 = arith.constant 0 : index
    %121 = vector.load %arg4[%c0_71, %c0_72, %c0_73, %c0_74] : memref<1x4x2x2xf32, #tpu.memory_space<vmem>>, vector<1x4x2x2xf32>
    %122 = vector.shape_cast %121 : vector<1x4x2x2xf32> to vector<4x2x2xf32>
    %123 = vector.shape_cast %120 : vector<4x2x2xf32> to vector<1x4x2x2xf32>
    tpu.vector_store %arg4[%c0_71, %c0_72, %c0_73, %c0_74], %123 {strides = array<i32>} : memref<1x4x2x2xf32, #tpu.memory_space<vmem>>, vector<1x4x2x2xf32>,
    %124 = vector.extract_strided_slice %96 {offsets = [0, 0, 0], sizes = [4, 1, 4], strides = [1, 1, 1]} : vector<4x4x4xf32> to vector<4x1x4xf32>
    %125 = vector.extract_strided_slice %96 {offsets = [0, 1, 0], sizes = [4, 1, 4], strides = [1, 1, 1]} : vector<4x4x4xf32> to vector<4x1x4xf32>
    %126 = arith.maximumf %124, %125 : vector<4x1x4xf32>
    %127 = vector.extract_strided_slice %96 {offsets = [0, 2, 0], sizes = [4, 1, 4], strides = [1, 1, 1]} : vector<4x4x4xf32> to vector<4x1x4xf32>
    %128 = arith.maximumf %126, %127 : vector<4x1x4xf32>
    %129 = vector.extract_strided_slice %96 {offsets = [0, 3, 0], sizes = [4, 1, 4], strides = [1, 1, 1]} : vector<4x4x4xf32> to vector<4x1x4xf32>
    %130 = arith.maximumf %128, %129 : vector<4x1x4xf32>
    %cst_75 = arith.constant dense<0xFF800000> : vector<4x1xf32>
    %131 = vector.multi_reduction <maximumf>, %130, %cst_75 [2] : vector<4x1x4xf32> to vector<4x1xf32>
    %132 = vector.shape_cast %131 : vector<4x1xf32> to vector<4x1x1xf32>
    %c0_76 = arith.constant 0 : index
    %c0_77 = arith.constant 0 : index
    %c0_78 = arith.constant 0 : index
    %c0_79 = arith.constant 0 : index
    %133 = vector.load %arg3[%c0_76, %c0_77, %c0_78, %c0_79] : memref<1x4x1x1xf32, #tpu.memory_space<vmem>>, vector<1x4x1x1xf32>
    %134 = vector.shape_cast %133 : vector<1x4x1x1xf32> to vector<4x1x1xf32>
    %135 = vector.shape_cast %132 : vector<4x1x1xf32> to vector<1x4x1x1xf32>
    tpu.vector_store %arg3[%c0_76, %c0_77, %c0_78, %c0_79], %135 {strides = array<i32>} : memref<1x4x1x1xf32, #tpu.memory_space<vmem>>, vector<1x4x1x1xf32>,
    return
  }
  func.func @transform_0(%arg0: i32, %arg1: i32) -> (i32, i32, i32, i32) {
    %c0_i32 = arith.constant 0 : i32
    %c0_i32_0 = arith.constant 0 : i32
    %c0_i32_1 = arith.constant 0 : i32
    return %arg0, %arg1, %c0_i32, %c0_i32_0 : i32, i32, i32, i32
  }
  func.func @transform_1(%arg0: i32, %arg1: i32) -> (i32, i32, i32, i32) {
    %c0_i32 = arith.constant 0 : i32
    %c0_i32_0 = arith.constant 0 : i32
    %c0_i32_1 = arith.constant 0 : i32
    return %arg0, %arg1, %c0_i32, %c0_i32_0 : i32, i32, i32, i32
  }
  func.func @transform_2(%arg0: i32, %arg1: i32) -> (i32, i32, i32, i32) {
    %c0_i32 = arith.constant 0 : i32
    %c0_i32_0 = arith.constant 0 : i32
    %c0_i32_1 = arith.constant 0 : i32
    return %arg0, %arg1, %c0_i32, %c0_i32_0 : i32, i32, i32, i32
  }
  func.func @transform_3(%arg0: i32, %arg1: i32) -> (i32, i32, i32, i32) {
    %c0_i32 = arith.constant 0 : i32
    %c0_i32_0 = arith.constant 0 : i32
    %c0_i32_1 = arith.constant 0 : i32
    return %arg0, %arg1, %c0_i32, %c0_i32_0 : i32, i32, i32, i32
  }
}

</mosaic_0001>

<llo_original>
// kernel: tpu_custom_call.1
$region0: #{tpu_custom_call.1}
  #allocation0 [shape = 'u32[]', space=smem, size = 0x4, offset = 0x4, fixed_abs, tag = 'smem constant byte address 0x4 - core index']
  #allocation1 [shape = 'u32[72,128]{1,0:T(1,128)}', space=vmem, size = 0x9000, scoped, tag = 'internal scratch']
  %s0 = inlined_call_operand.hbm [shape: f32[2,4,16,16], index: 0, kind: input, shape index: {}]
  %s1 = inlined_call_operand.vmem [shape: f32[2,4,1,1], index: 1, kind: output, shape index: {0}]
  %s2 = inlined_call_operand.vmem [shape: f32[2,4,2,2], index: 2, kind: output, shape index: {1}]
  %s3 = inlined_call_operand.hbm [shape: f32[2,4,4,4], index: 3, kind: output, shape index: {2}]
  %4 = xla_tuple %s1, %s2, %s3
  %s5 = sld [smem:[#allocation0]]
  $region57: #{tpu_custom_call.1} parent=0
    _
  %s7 = ssub.s32 1, %s5
  %s8 = scalar_select 0, %s7, %s5
  $region1: #{tpu_custom_call.1} parent=0
    #allocation2 [shape = 'u8[65536]{0}', space=vmem, size = 0x10000, scoped, tag = 'input window, operand 0']
    #allocation3 [shape = 's32[2]{0}', space=sflag, size = 0x8, scoped, tag = 'scoped memory for tpu_custom_call.1']
    #allocation4 [shape = 's32[2]{0}', space=sflag, size = 0x8, scoped, tag = 'scoped memory for tpu_custom_call.1']
    #allocation5 [shape = 'u8[16384]{0}', space=vmem, size = 0x4000, scoped, tag = 'output window, operand 2']
    %9 = vsyncpa [#allocation3], 0
    %s10 = scalar_lea.sflag [#allocation3], 1
    %11 = vsyncpa %s10, 0
    %12 = vsyncpa [#allocation4], 0
    %s13 = scalar_lea.sflag [#allocation4], 1
    %14 = vsyncpa %s13, 0
    loop: start=0, step=1, limit=4
    $region2: #{tpu_custom_call.1} parent=1 // loop_pre_header
      _
    $region3: #{tpu_custom_call.1} parent=1 // loop_header
      %s16 = sphi 0, %s20
      %p17 = scmp.ge.s32.totalorder %s16, 4
      %s23 = sphi 0, %s35
      %s24 = sphi 0, %s31
      %s25 = sphi 0, %s23
      %s26 = sphi 0, %s24
      %s27 = sphi 0, %s25
      %s28 = sphi 0, %s26
      %s40 = sphi 0, %s42
      %s43 = sphi 0, %s40
      %s44 = sphi 0, %s43
      %s60 = sphi 0, %s44
      %s68 = sphi 0, %s70
      %s71 = sphi 0, %s68
      %s72 = sphi 0, %s71
      %s88 = sphi 0, %s72
      %s96 = sphi 0, %s98
      %s99 = sphi 0, %s96
      %s100 = sphi 0, %s99
      %s116 = sphi 0, %s100
      %s124 = sphi 0, %s126
      %s127 = sphi 0, %s124
      %s128 = sphi 0, %s127
      %s144 = sphi 0, %s128
    $region4: #{tpu_custom_call.1} parent=1 // loop_header_branch
      %19 = sbr.rel (%p17) target = $region8
    $region5: #{tpu_custom_call.1} parent=1 // loop_body
      %s21 = ssub.s32 %s16, 1
      %s22 = ssub.s32 %s16, 2
      %s29 = sadd.s32 1, %s24
      %p30 = scmp.ge.s32.totalorder %s29, 1
      %s31 = scalar_select %p30, 0, %s29
      %s32 = sadd.s32 1, %s23
      %s33 = scalar_select %p30, %s32, %s23
      %p34 = scmp.ge.s32.totalorder %s33, 2
      %s35 = scalar_select %p34, 0, %s33
      %s36 = ssub.s32 %s23, %s35
      %s37 = ssub.s32 %s24, %s31
      %s38 = sor.u32 %s36, %s37
      %p39 = scmp.eq.s32.totalorder %s38, 0
      %s41 = sadd.s32 %s40, 1
      %s42 = scalar_select %p39, %s40, %s41
      %p45 = pneg %p39
      %p46 = scmp.eq.s32.totalorder %s16, 1
      %p47 = por %p45, %p46
      %p48 = scmp.ne.s32.totalorder %s40, %s43
      %p49 = scmp.eq.s32.totalorder %s16, 0
      %p50 = por %p48, %p49
      %p51 = scmp.ne.s32.totalorder %s40, %s43
      %p52 = scmp.eq.s32.totalorder %s21, 1
      %p53 = por %p51, %p52
      %p54 = scmp.ne.s32.totalorder %s43, %s44
      %p55 = scmp.eq.s32.totalorder %s21, 0
      %p56 = por %p54, %p55
      %p57 = scmp.ne.s32.totalorder %s43, %s44
      %p58 = scmp.eq.s32.totalorder %s22, 1
      %p59 = por %p57, %p58
      %p61 = scmp.ne.s32.totalorder %s44, %s60
      %p62 = scmp.eq.s32.totalorder %s22, 0
      %p63 = por %p61, %p62
      %s64 = ssub.s32 %s23, %s35
      %s65 = ssub.s32 %s24, %s31
      %s66 = sor.u32 %s64, %s65
      %p67 = scmp.eq.s32.totalorder %s66, 0
      %s69 = sadd.s32 %s68, 1
      %s70 = scalar_select %p67, %s68, %s69
      %p73 = pneg %p67
      %p74 = scmp.eq.s32.totalorder %s16, 1
      %p75 = por %p73, %p74
      %p76 = scmp.ne.s32.totalorder %s68, %s71
      %p77 = scmp.eq.s32.totalorder %s16, 0
      %p78 = por %p76, %p77
      %p79 = scmp.ne.s32.totalorder %s68, %s71
      %p80 = scmp.eq.s32.totalorder %s21, 1
      %p81 = por %p79, %p80
      %p82 = scmp.ne.s32.totalorder %s71, %s72
      %p83 = scmp.eq.s32.totalorder %s21, 0
      %p84 = por %p82, %p83
      %p85 = scmp.ne.s32.totalorder %s71, %s72
      %p86 = scmp.eq.s32.totalorder %s22, 1
      %p87 = por %p85, %p86
      %p89 = scmp.ne.s32.totalorder %s72, %s88
      %p90 = scmp.eq.s32.totalorder %s22, 0
      %p91 = por %p89, %p90
      %s92 = ssub.s32 %s23, %s35
      %s93 = ssub.s32 %s24, %s31
      %s94 = sor.u32 %s92, %s93
      %p95 = scmp.eq.s32.totalorder %s94, 0
      %s97 = sadd.s32 %s96, 1
      %s98 = scalar_select %p95, %s96, %s97
      %p101 = pneg %p95
      %p102 = scmp.eq.s32.totalorder %s16, 1
      %p103 = por %p101, %p102
      %p104 = scmp.ne.s32.totalorder %s96, %s99
      %p105 = scmp.eq.s32.totalorder %s16, 0
      %p106 = por %p104, %p105
      %p107 = scmp.ne.s32.totalorder %s96, %s99
      %p108 = scmp.eq.s32.totalorder %s21, 1
      %p109 = por %p107, %p108
      %p110 = scmp.ne.s32.totalorder %s99, %s100
      %p111 = scmp.eq.s32.totalorder %s21, 0
      %p112 = por %p110, %p111
      %p113 = scmp.ne.s32.totalorder %s99, %s100
      %p114 = scmp.eq.s32.totalorder %s22, 1
      %p115 = por %p113, %p114
      %p117 = scmp.ne.s32.totalorder %s100, %s116
      %p118 = scmp.eq.s32.totalorder %s22, 0
      %p119 = por %p117, %p118
      %s120 = ssub.s32 %s23, %s35
      %s121 = ssub.s32 %s24, %s31
      %s122 = sor.u32 %s120, %s121
      %p123 = scmp.eq.s32.totalorder %s122, 0
      %s125 = sadd.s32 %s124, 1
      %s126 = scalar_select %p123, %s124, %s125
      %p129 = pneg %p123
      %p130 = scmp.eq.s32.totalorder %s16, 1
      %p131 = por %p129, %p130
      %p132 = scmp.ne.s32.totalorder %s124, %s127
      %p133 = scmp.eq.s32.totalorder %s16, 0
      %p134 = por %p132, %p133
      %p135 = scmp.ne.s32.totalorder %s124, %s127
      %p136 = scmp.eq.s32.totalorder %s21, 1
      %p137 = por %p135, %p136
      %p138 = scmp.ne.s32.totalorder %s127, %s128
      %p139 = scmp.eq.s32.totalorder %s21, 0
      %p140 = por %p138, %p139
      %p141 = scmp.ne.s32.totalorder %s127, %s128
      %p142 = scmp.eq.s32.totalorder %s22, 1
      %p143 = por %p141, %p142
      %p145 = scmp.ne.s32.totalorder %s128, %s144
      %p146 = scmp.eq.s32.totalorder %s22, 0
      %p147 = por %p145, %p146
      %p148 = scmp.le.s32.totalorder 1, %s16
      %p149 = scmp.lt.s32.totalorder %s16, 3
      %p150 = pnand %p148, %p149
      %p151 = pneg %p150
      // Predicated region
      $region9: #{tpu_custom_call.1} parent=5 // pred_check
        _
      $region10: #{tpu_custom_call.1} parent=5 // pred_check_branch
        %153 = sbr.rel (%p150) target = $region12
      $region11: #{tpu_custom_call.1} parent=5 // pred_region
        %s154 = ssub.s32 %s16, 1
      $region12: #{tpu_custom_call.1} parent=5 // pred_fallthru
        _
      %p155 = scmp.lt.s32.totalorder %s16, 2
      // Predicated region
      $region13: #{tpu_custom_call.1} parent=5 // pred_check
        %p156 = pneg %p155
      $region14: #{tpu_custom_call.1} parent=5 // pred_check_branch
        %158 = sbr.rel (%p156) target = $region16
      $region15: #{tpu_custom_call.1} parent=5 // pred_region
        // Predicated region
        $region17: #{tpu_custom_call.1} parent=15 // pred_check
          %p159 = pneg %p50
        $region18: #{tpu_custom_call.1} parent=15 // pred_check_branch
          %161 = sbr.rel (%p159) target = $region20
        $region19: #{tpu_custom_call.1} parent=15 // pred_region
          %s162 = sand.u32 %s40, 1
          %s163 = scalar_lea.sflag [#allocation3], %s162
          %s164 = sand.u32 %s40, 1
          %s165 = smul.addr %s164, 64
          %s166 = scalar_lea.vmem [#allocation2], %s165
          %s167 = smul.u32 4, %s24
          %169 = vsyncadd %s163, 0
          %s170 = smul.addr %s167, 2
          %s171 = smul.addr %s23, 8
          %s172 = sadd.s32 %s170, %s171
          %s173 = smul.addr %s172, 8
          %s174 = scalar_lea.hbm %s0, %s173
          %s175 = sshll.u32 %s174, 4
          %s176 = int_to_ptr.hbm [resolvable:$true] %s175
          %s177 = sshll.u32 %s166, 4
          %s178 = int_to_ptr.vmem [resolvable:$true] %s177
          %183 = dma.hbm_to_vmem [thread:$0]  %s176, 1024, %s178, %s163, 128, 128, 8
        $region20: #{tpu_custom_call.1} parent=15 // pred_fallthru
          _
      $region16: #{tpu_custom_call.1} parent=5 // pred_fallthru
        _
      %p184 = scmp.le.s32.totalorder 1, %s16
      %p185 = scmp.lt.s32.totalorder %s16, 3
      %p186 = pnand %p184, %p185
      %p187 = pneg %p186
      // Predicated region
      $region21: #{tpu_custom_call.1} parent=5 // pred_check
        _
      $region22: #{tpu_custom_call.1} parent=5 // pred_check_branch
        %189 = sbr.rel (%p186) target = $region24
      $region23: #{tpu_custom_call.1} parent=5 // pred_region
        %s190 = ssub.s32 %s16, 1
        %s191 = sand.u32 %s43, 1
        %s192 = scalar_lea.sflag [#allocation3], %s191
        %s193 = sand.u32 %s43, 1
        %s194 = smul.addr %s193, 64
        %s195 = scalar_lea.vmem [#allocation2], %s194
        // Predicated region
        $region25: #{tpu_custom_call.1} parent=23 // pred_check
          %p196 = pneg %p56
        $region26: #{tpu_custom_call.1} parent=23 // pred_check_branch
          %198 = sbr.rel (%p196) target = $region28
        $region27: #{tpu_custom_call.1} parent=23 // pred_region
          %200 = dma.done %s192, 1024
        $region28: #{tpu_custom_call.1} parent=23 // pred_fallthru
          _
        %s201 = sand.u32 %s43, 1
        %s202 = scalar_lea.sflag [#allocation3], %s201
        %s203 = sand.u32 %s43, 1
        %s204 = smul.addr %s203, 64
        %s205 = scalar_lea.vmem [#allocation2], %s204
        %p206 = pneg %p56
        %p207 = pneg %p53
        %p208 = pneg %p84
        %p209 = pneg %p81
        %s210 = smul.u32 4, %s26
        %p211 = scmp.lt.s32.totalorder %s25, 1
        %s212 = scalar_select %p211, %s25, 1
        %p213 = scmp.lt.s32.totalorder %s210, 3
        %s214 = scalar_select %p213, %s210, 3
        %s215 = smul.addr %s212, 4
        %s216 = sadd.s32 %s214, %s215
        %s217 = scalar_lea.vmem %s1, %s216
        %p218 = pneg %p112
        %p219 = pneg %p109
        %s220 = smul.u32 4, %s26
        %p221 = scmp.lt.s32.totalorder %s25, 1
        %s222 = scalar_select %p221, %s25, 1
        %p223 = scmp.lt.s32.totalorder %s220, 3
        %s224 = scalar_select %p223, %s220, 3
        %s225 = smul.addr %s222, 4
        %s226 = sadd.s32 %s224, %s225
        %s227 = smul.addr %s226, 2
        %s228 = scalar_lea.vmem %s2, %s227
        %p229 = pneg %p140
        %p230 = pneg %p137
        %s231 = sand.u32 %s127, 1
        %s232 = scalar_lea.sflag [#allocation4], %s231
        %s233 = sand.u32 %s127, 1
        %s234 = smul.addr %s233, 16
        %s235 = scalar_lea.vmem [#allocation5], %s234
        %s236 = smul.u32 4, %s26
        %s237 = smul.u32 4, %s26
        %p238 = scmp.lt.s32.totalorder %s25, 1
        %s239 = scalar_select %p238, %s25, 1
        %p240 = scmp.lt.s32.totalorder %s237, 3
        %s241 = scalar_select %p240, %s237, 3
        %s242 = smul.addr %s239, 4
        %s243 = sadd.s32 %s241, %s242
        %s244 = scalar_lea.vmem %s1, %s243
        %s245 = smul.u32 4, %s26
        %s246 = smul.u32 4, %s26
        %p247 = scmp.lt.s32.totalorder %s25, 1
        %s248 = scalar_select %p247, %s25, 1
        %p249 = scmp.lt.s32.totalorder %s246, 3
        %s250 = scalar_select %p249, %s246, 3
        %s251 = smul.addr %s248, 4
        %s252 = sadd.s32 %s250, %s251
        %s253 = smul.addr %s252, 2
        %s254 = scalar_lea.vmem %s2, %s253
        %s255 = smul.u32 4, %s26
        %s256 = smul.u32 4, %s26
        %v257 = vld [vmem:[%s195] sm:$0x1]
        %v258 = vld [vmem:[%s195 + $0x10] sm:$0x1]
        %v259 = vld [vmem:[%s195 + $0x20] sm:$0x1]
        %v260 = vld [vmem:[%s195 + $0x30] sm:$0x1]
        %v261 = vld [vmem:[%s195 + $0x1] sm:$0x1]
        %v262 = vld [vmem:[%s195 + $0x11] sm:$0x1]
        %v263 = vld [vmem:[%s195 + $0x21] sm:$0x1]
        %v264 = vld [vmem:[%s195 + $0x31] sm:$0x1]
        %v265 = vmax.f32 %v257, %v261
        %v266 = vmax.f32 %v258, %v262
        %v267 = vmax.f32 %v259, %v263
        %v268 = vmax.f32 %v260, %v264
        %v269 = vld [vmem:[%s195 + $0x2] sm:$0x1]
        %v270 = vld [vmem:[%s195 + $0x12] sm:$0x1]
        %v271 = vld [vmem:[%s195 + $0x22] sm:$0x1]
        %v272 = vld [vmem:[%s195 + $0x32] sm:$0x1]
        %v273 = vmax.f32 %v265, %v269
        %v274 = vmax.f32 %v266, %v270
        %v275 = vmax.f32 %v267, %v271
        %v276 = vmax.f32 %v268, %v272
        %v277 = vld [vmem:[%s195 + $0x3] sm:$0x1]
        %v278 = vld [vmem:[%s195 + $0x13] sm:$0x1]
        %v279 = vld [vmem:[%s195 + $0x23] sm:$0x1]
        %v280 = vld [vmem:[%s195 + $0x33] sm:$0x1]
        %v281 = vmax.f32 %v273, %v277
        %v282 = vmax.f32 %v274, %v278
        %v283 = vmax.f32 %v275, %v279
        %v284 = vmax.f32 %v276, %v280
        %vm285 = vcmask 24576
        %v286 = vsel %vm285, %v281, -inf
        %287 = vmax.xlane.f32.xlu0 %v286
        %v288 = vpop.xlane.xlu0 %287
        %v289 = vsel %vm285, %v282, -inf
        %290 = vmax.xlane.f32.xlu0 %v289
        %v291 = vpop.xlane.xlu0 %290
        %v292 = vsel %vm285, %v283, -inf
        %293 = vmax.xlane.f32.xlu0 %v292
        %v294 = vpop.xlane.xlu0 %293
        %v295 = vsel %vm285, %v284, -inf
        %296 = vmax.xlane.f32.xlu0 %v295
        %v297 = vpop.xlane.xlu0 %296
        %vm298 = vcmask 57376
        %v299 = vsel %vm298, %v281, -inf
        %300 = vmax.xlane.f32.xlu0 %v299
        %v301 = vpop.xlane.xlu0 %300
        %v302 = vsel %vm298, %v282, -inf
        %303 = vmax.xlane.f32.xlu0 %v302
        %v304 = vpop.xlane.xlu0 %303
        %v305 = vsel %vm298, %v283, -inf
        %306 = vmax.xlane.f32.xlu0 %v305
        %v307 = vpop.xlane.xlu0 %306
        %v308 = vsel %vm298, %v284, -inf
        %309 = vmax.xlane.f32.xlu0 %v308
        %v310 = vpop.xlane.xlu0 %309
        %vm311 = vcmask 90176
        %v312 = vsel %vm311, %v281, -inf
        %313 = vmax.xlane.f32.xlu0 %v312
        %v314 = vpop.xlane.xlu0 %313
        %v315 = vsel %vm311, %v282, -inf
        %316 = vmax.xlane.f32.xlu0 %v315
        %v317 = vpop.xlane.xlu0 %316
        %v318 = vsel %vm311, %v283, -inf
        %319 = vmax.xlane.f32.xlu0 %v318
        %v320 = vpop.xlane.xlu0 %319
        %v321 = vsel %vm311, %v284, -inf
        %322 = vmax.xlane.f32.xlu0 %v321
        %v323 = vpop.xlane.xlu0 %322
        %vm324 = vcmask 122976
        %v325 = vsel %vm324, %v281, -inf
        %326 = vmax.xlane.f32.xlu0 %v325
        %v327 = vpop.xlane.xlu0 %326
        %v328 = vsel %vm324, %v282, -inf
        %329 = vmax.xlane.f32.xlu0 %v328
        %v330 = vpop.xlane.xlu0 %329
        %v331 = vsel %vm324, %v283, -inf
        %332 = vmax.xlane.f32.xlu0 %v331
        %v333 = vpop.xlane.xlu0 %332
        %v334 = vsel %vm324, %v284, -inf
        %335 = vmax.xlane.f32.xlu0 %v334
        %v336 = vpop.xlane.xlu0 %335
        %vm337 = vcmask 7168
        %v338 = vsel %vm337, %v288, %v301
        %v339 = vsel %vm337, %v291, %v304
        %v340 = vsel %vm337, %v294, %v307
        %v341 = vsel %vm337, %v297, %v310
        %vm342 = vcmask 15360
        %v343 = vsel %vm342, %v338, %v314
        %v344 = vsel %vm342, %v339, %v317
        %v345 = vsel %vm342, %v340, %v320
        %v346 = vsel %vm342, %v341, %v323
        %vm347 = vcmask 23552
        %v348 = vsel %vm347, %v343, %v327
        %v349 = vsel %vm347, %v344, %v330
        %v350 = vsel %vm347, %v345, %v333
        %v351 = vsel %vm347, %v346, %v336
        %v352 = vld [vmem:[%s195 + $0x4] sm:$0x1]
        %v353 = vld [vmem:[%s195 + $0x14] sm:$0x1]
        %v354 = vld [vmem:[%s195 + $0x24] sm:$0x1]
        %v355 = vld [vmem:[%s195 + $0x34] sm:$0x1]
        %v356 = vld [vmem:[%s195 + $0x5] sm:$0x1]
        %v357 = vld [vmem:[%s195 + $0x15] sm:$0x1]
        %v358 = vld [vmem:[%s195 + $0x25] sm:$0x1]
        %v359 = vld [vmem:[%s195 + $0x35] sm:$0x1]
        %v360 = vmax.f32 %v352, %v356
        %v361 = vmax.f32 %v353, %v357
        %v362 = vmax.f32 %v354, %v358
        %v363 = vmax.f32 %v355, %v359
        %v364 = vld [vmem:[%s195 + $0x6] sm:$0x1]
        %v365 = vld [vmem:[%s195 + $0x16] sm:$0x1]
        %v366 = vld [vmem:[%s195 + $0x26] sm:$0x1]
        %v367 = vld [vmem:[%s195 + $0x36] sm:$0x1]
        %v368 = vmax.f32 %v360, %v364
        %v369 = vmax.f32 %v361, %v365
        %v370 = vmax.f32 %v362, %v366
        %v371 = vmax.f32 %v363, %v367
        %v372 = vld [vmem:[%s195 + $0x7] sm:$0x1]
        %v373 = vld [vmem:[%s195 + $0x17] sm:$0x1]
        %v374 = vld [vmem:[%s195 + $0x27] sm:$0x1]
        %v375 = vld [vmem:[%s195 + $0x37] sm:$0x1]
        %v376 = vmax.f32 %v368, %v372
        %v377 = vmax.f32 %v369, %v373
        %v378 = vmax.f32 %v370, %v374
        %v379 = vmax.f32 %v371, %v375
        %v380 = vsel %vm285, %v376, -inf
        %381 = vmax.xlane.f32.xlu0 %v380
        %v382 = vpop.xlane.xlu0 %381
        %v383 = vsel %vm285, %v377, -inf
        %384 = vmax.xlane.f32.xlu0 %v383
        %v385 = vpop.xlane.xlu0 %384
        %v386 = vsel %vm285, %v378, -inf
        %387 = vmax.xlane.f32.xlu0 %v386
        %v388 = vpop.xlane.xlu0 %387
        %v389 = vsel %vm285, %v379, -inf
        %390 = vmax.xlane.f32.xlu0 %v389
        %v391 = vpop.xlane.xlu0 %390
        %v392 = vsel %vm298, %v376, -inf
        %393 = vmax.xlane.f32.xlu0 %v392
        %v394 = vpop.xlane.xlu0 %393
        %v395 = vsel %vm298, %v377, -inf
        %396 = vmax.xlane.f32.xlu0 %v395
        %v397 = vpop.xlane.xlu0 %396
        %v398 = vsel %vm298, %v378, -inf
        %399 = vmax.xlane.f32.xlu0 %v398
        %v400 = vpop.xlane.xlu0 %399
        %v401 = vsel %vm298, %v379, -inf
        %402 = vmax.xlane.f32.xlu0 %v401
        %v403 = vpop.xlane.xlu0 %402
        %v404 = vsel %vm311, %v376, -inf
        %405 = vmax.xlane.f32.xlu0 %v404
        %v406 = vpop.xlane.xlu0 %405
        %v407 = vsel %vm311, %v377, -inf
        %408 = vmax.xlane.f32.xlu0 %v407
        %v409 = vpop.xlane.xlu0 %408
        %v410 = vsel %vm311, %v378, -inf
        %411 = vmax.xlane.f32.xlu0 %v410
        %v412 = vpop.xlane.xlu0 %411
        %v413 = vsel %vm311, %v379, -inf
        %414 = vmax.xlane.f32.xlu0 %v413
        %v415 = vpop.xlane.xlu0 %414
        %v416 = vsel %vm324, %v376, -inf
        %417 = vmax.xlane.f32.xlu0 %v416
        %v418 = vpop.xlane.xlu0 %417
        %v419 = vsel %vm324, %v377, -inf
        %420 = vmax.xlane.f32.xlu0 %v419
        %v421 = vpop.xlane.xlu0 %420
        %v422 = vsel %vm324, %v378, -inf
        %423 = vmax.xlane.f32.xlu0 %v422
        %v424 = vpop.xlane.xlu0 %423
        %v425 = vsel %vm324, %v379, -inf
        %426 = vmax.xlane.f32.xlu0 %v425
        %v427 = vpop.xlane.xlu0 %426
        %v428 = vsel %vm337, %v382, %v394
        %v429 = vsel %vm337, %v385, %v397
        %v430 = vsel %vm337, %v388, %v400
        %v431 = vsel %vm337, %v391, %v403
        %v432 = vsel %vm342, %v428, %v406
        %v433 = vsel %vm342, %v429, %v409
        %v434 = vsel %vm342, %v430, %v412
        %v435 = vsel %vm342, %v431, %v415
        %v436 = vsel %vm347, %v432, %v418
        %v437 = vsel %vm347, %v433, %v421
        %v438 = vsel %vm347, %v434, %v424
        %v439 = vsel %vm347, %v435, %v427
        %v440 = vld [vmem:[%s195 + $0x8] sm:$0x1]
        %v441 = vld [vmem:[%s195 + $0x18] sm:$0x1]
        %v442 = vld [vmem:[%s195 + $0x28] sm:$0x1]
        %v443 = vld [vmem:[%s195 + $0x38] sm:$0x1]
        %v444 = vld [vmem:[%s195 + $0x9] sm:$0x1]
        %v445 = vld [vmem:[%s195 + $0x19] sm:$0x1]
        %v446 = vld [vmem:[%s195 + $0x29] sm:$0x1]
        %v447 = vld [vmem:[%s195 + $0x39] sm:$0x1]
        %v448 = vmax.f32 %v440, %v444
        %v449 = vmax.f32 %v441, %v445
        %v450 = vmax.f32 %v442, %v446
        %v451 = vmax.f32 %v443, %v447
        %v452 = vld [vmem:[%s195 + $0xa] sm:$0x1]
        %v453 = vld [vmem:[%s195 + $0x1a] sm:$0x1]
        %v454 = vld [vmem:[%s195 + $0x2a] sm:$0x1]
        %v455 = vld [vmem:[%s195 + $0x3a] sm:$0x1]
        %v456 = vmax.f32 %v448, %v452
        %v457 = vmax.f32 %v449, %v453
        %v458 = vmax.f32 %v450, %v454
        %v459 = vmax.f32 %v451, %v455
        %v460 = vld [vmem:[%s195 + $0xb] sm:$0x1]
        %v461 = vld [vmem:[%s195 + $0x1b] sm:$0x1]
        %v462 = vld [vmem:[%s195 + $0x2b] sm:$0x1]
        %v463 = vld [vmem:[%s195 + $0x3b] sm:$0x1]
        %v464 = vmax.f32 %v456, %v460
        %v465 = vmax.f32 %v457, %v461
        %v466 = vmax.f32 %v458, %v462
        %v467 = vmax.f32 %v459, %v463
        %v468 = vsel %vm285, %v464, -inf
        %469 = vmax.xlane.f32.xlu0 %v468
        %v470 = vpop.xlane.xlu0 %469
        %v471 = vsel %vm285, %v465, -inf
        %472 = vmax.xlane.f32.xlu0 %v471
        %v473 = vpop.xlane.xlu0 %472
        %v474 = vsel %vm285, %v466, -inf
        %475 = vmax.xlane.f32.xlu0 %v474
        %v476 = vpop.xlane.xlu0 %475
        %v477 = vsel %vm285, %v467, -inf
        %478 = vmax.xlane.f32.xlu0 %v477
        %v479 = vpop.xlane.xlu0 %478
        %v480 = vsel %vm298, %v464, -inf
        %481 = vmax.xlane.f32.xlu0 %v480
        %v482 = vpop.xlane.xlu0 %481
        %v483 = vsel %vm298, %v465, -inf
        %484 = vmax.xlane.f32.xlu0 %v483
        %v485 = vpop.xlane.xlu0 %484
        %v486 = vsel %vm298, %v466, -inf
        %487 = vmax.xlane.f32.xlu0 %v486
        %v488 = vpop.xlane.xlu0 %487
        %v489 = vsel %vm298, %v467, -inf
        %490 = vmax.xlane.f32.xlu0 %v489
        %v491 = vpop.xlane.xlu0 %490
        %v492 = vsel %vm311, %v464, -inf
        %493 = vmax.xlane.f32.xlu0 %v492
        %v494 = vpop.xlane.xlu0 %493
        %v495 = vsel %vm311, %v465, -inf
        %496 = vmax.xlane.f32.xlu0 %v495
        %v497 = vpop.xlane.xlu0 %496
        %v498 = vsel %vm311, %v466, -inf
        %499 = vmax.xlane.f32.xlu0 %v498
        %v500 = vpop.xlane.xlu0 %499
        %v501 = vsel %vm311, %v467, -inf
        %502 = vmax.xlane.f32.xlu0 %v501
        %v503 = vpop.xlane.xlu0 %502
        %v504 = vsel %vm324, %v464, -inf
        %505 = vmax.xlane.f32.xlu0 %v504
        %v506 = vpop.xlane.xlu0 %505
        %v507 = vsel %vm324, %v465, -inf
        %508 = vmax.xlane.f32.xlu0 %v507
        %v509 = vpop.xlane.xlu0 %508
        %v510 = vsel %vm324, %v466, -inf
        %511 = vmax.xlane.f32.xlu0 %v510
        %v512 = vpop.xlane.xlu0 %511
        %v513 = vsel %vm324, %v467, -inf
        %514 = vmax.xlane.f32.xlu0 %v513
        %v515 = vpop.xlane.xlu0 %514
        %v516 = vsel %vm337, %v470, %v482
        %v517 = vsel %vm337, %v473, %v485
        %v518 = vsel %vm337, %v476, %v488
        %v519 = vsel %vm337, %v479, %v491
        %v520 = vsel %vm342, %v516, %v494
        %v521 = vsel %vm342, %v517, %v497
        %v522 = vsel %vm342, %v518, %v500
        %v523 = vsel %vm342, %v519, %v503
        %v524 = vsel %vm347, %v520, %v506
        %v525 = vsel %vm347, %v521, %v509
        %v526 = vsel %vm347, %v522, %v512
        %v527 = vsel %vm347, %v523, %v515
        %v528 = vld [vmem:[%s195 + $0xc] sm:$0x1]
        %v529 = vld [vmem:[%s195 + $0x1c] sm:$0x1]
        %v530 = vld [vmem:[%s195 + $0x2c] sm:$0x1]
        %v531 = vld [vmem:[%s195 + $0x3c] sm:$0x1]
        %v532 = vld [vmem:[%s195 + $0xd] sm:$0x1]
        %v533 = vld [vmem:[%s195 + $0x1d] sm:$0x1]
        %v534 = vld [vmem:[%s195 + $0x2d] sm:$0x1]
        %v535 = vld [vmem:[%s195 + $0x3d] sm:$0x1]
        %v536 = vmax.f32 %v528, %v532
        %v537 = vmax.f32 %v529, %v533
        %v538 = vmax.f32 %v530, %v534
        %v539 = vmax.f32 %v531, %v535
        %v540 = vld [vmem:[%s195 + $0xe] sm:$0x1]
        %v541 = vld [vmem:[%s195 + $0x1e] sm:$0x1]
        %v542 = vld [vmem:[%s195 + $0x2e] sm:$0x1]
        %v543 = vld [vmem:[%s195 + $0x3e] sm:$0x1]
        %v544 = vmax.f32 %v536, %v540
        %v545 = vmax.f32 %v537, %v541
        %v546 = vmax.f32 %v538, %v542
        %v547 = vmax.f32 %v539, %v543
        %v548 = vld [vmem:[%s195 + $0xf] sm:$0x1]
        %v549 = vld [vmem:[%s195 + $0x1f] sm:$0x1]
        %v550 = vld [vmem:[%s195 + $0x2f] sm:$0x1]
        %v551 = vld [vmem:[%s195 + $0x3f] sm:$0x1]
        %v552 = vmax.f32 %v544, %v548
        %v553 = vmax.f32 %v545, %v549
        %v554 = vmax.f32 %v546, %v550
        %v555 = vmax.f32 %v547, %v551
        %v556 = vsel %vm285, %v552, -inf
        %557 = vmax.xlane.f32.xlu0 %v556
        %v558 = vpop.xlane.xlu0 %557
        %v559 = vsel %vm285, %v553, -inf
        %560 = vmax.xlane.f32.xlu0 %v559
        %v561 = vpop.xlane.xlu0 %560
        %v562 = vsel %vm285, %v554, -inf
        %563 = vmax.xlane.f32.xlu0 %v562
        %v564 = vpop.xlane.xlu0 %563
        %v565 = vsel %vm285, %v555, -inf
        %566 = vmax.xlane.f32.xlu0 %v565
        %v567 = vpop.xlane.xlu0 %566
        %v568 = vsel %vm298, %v552, -inf
        %569 = vmax.xlane.f32.xlu0 %v568
        %v570 = vpop.xlane.xlu0 %569
        %v571 = vsel %vm298, %v553, -inf
        %572 = vmax.xlane.f32.xlu0 %v571
        %v573 = vpop.xlane.xlu0 %572
        %v574 = vsel %vm298, %v554, -inf
        %575 = vmax.xlane.f32.xlu0 %v574
        %v576 = vpop.xlane.xlu0 %575
        %v577 = vsel %vm298, %v555, -inf
        %578 = vmax.xlane.f32.xlu0 %v577
        %v579 = vpop.xlane.xlu0 %578
        %v580 = vsel %vm311, %v552, -inf
        %581 = vmax.xlane.f32.xlu0 %v580
        %v582 = vpop.xlane.xlu0 %581
        %v583 = vsel %vm311, %v553, -inf
        %584 = vmax.xlane.f32.xlu0 %v583
        %v585 = vpop.xlane.xlu0 %584
        %v586 = vsel %vm311, %v554, -inf
        %587 = vmax.xlane.f32.xlu0 %v586
        %v588 = vpop.xlane.xlu0 %587
        %v589 = vsel %vm311, %v555, -inf
        %590 = vmax.xlane.f32.xlu0 %v589
        %v591 = vpop.xlane.xlu0 %590
        %v592 = vsel %vm324, %v552, -inf
        %593 = vmax.xlane.f32.xlu0 %v592
        %v594 = vpop.xlane.xlu0 %593
        %v595 = vsel %vm324, %v553, -inf
        %596 = vmax.xlane.f32.xlu0 %v595
        %v597 = vpop.xlane.xlu0 %596
        %v598 = vsel %vm324, %v554, -inf
        %599 = vmax.xlane.f32.xlu0 %v598
        %v600 = vpop.xlane.xlu0 %599
        %v601 = vsel %vm324, %v555, -inf
        %602 = vmax.xlane.f32.xlu0 %v601
        %v603 = vpop.xlane.xlu0 %602
        %v604 = vsel %vm337, %v558, %v570
        %v605 = vsel %vm337, %v561, %v573
        %v606 = vsel %vm337, %v564, %v576
        %v607 = vsel %vm337, %v567, %v579
        %v608 = vsel %vm342, %v604, %v582
        %v609 = vsel %vm342, %v605, %v585
        %v610 = vsel %vm342, %v606, %v588
        %v611 = vsel %vm342, %v607, %v591
        %v612 = vsel %vm347, %v608, %v594
        %v613 = vsel %vm347, %v609, %v597
        %v614 = vsel %vm347, %v610, %v600
        %v615 = vsel %vm347, %v611, %v603
        %v620 = vrot.slane %v436, 7
        %v621 = vrot.slane %v437, 7
        %v622 = vrot.slane %v438, 7
        %v623 = vrot.slane %v439, 7
        %v632 = vrot.slane %v524, 6
        %v633 = vrot.slane %v525, 6
        %v634 = vrot.slane %v526, 6
        %v635 = vrot.slane %v527, 6
        %v644 = vrot.slane %v612, 5
        %v645 = vrot.slane %v613, 5
        %v646 = vrot.slane %v614, 5
        %v647 = vrot.slane %v615, 5
        %vm652 = vcmask 1040384
        %v653 = vsel %vm652, %v348, %v620
        %v654 = vsel %vm652, %v349, %v621
        %v655 = vsel %vm652, %v350, %v622
        %v656 = vsel %vm652, %v351, %v623
        %vm657 = vcmask 1041408
        %v658 = vsel %vm657, %v653, %v632
        %v659 = vsel %vm657, %v654, %v633
        %v660 = vsel %vm657, %v655, %v634
        %v661 = vsel %vm657, %v656, %v635
        %vm662 = vcmask 1042432
        %v663 = vsel %vm662, %v658, %v644
        %v664 = vsel %vm662, %v659, %v645
        %v665 = vsel %vm662, %v660, %v646
        %v666 = vsel %vm662, %v661, %v647
        %vm667 = vcmask 27648
        %668 = vst.msk [vmem:[%s235] sm:$0xf] %vm667, %v663
        %669 = vst.msk [vmem:[%s235 + $0x4] sm:$0xf] %vm667, %v664
        %670 = vst.msk [vmem:[%s235 + $0x8] sm:$0xf] %vm667, %v665
        %671 = vst.msk [vmem:[%s235 + $0xc] sm:$0xf] %vm667, %v666
        %v676 = vrot.slane %v663, 1
        %v677 = vrot.slane %v664, 1
        %v678 = vrot.slane %v665, 1
        %v679 = vrot.slane %v666, 1
        %v684 = vmax.f32 %v663, %v676
        %v685 = vmax.f32 %v664, %v677
        %v686 = vmax.f32 %v665, %v678
        %v687 = vmax.f32 %v666, %v679
        %vm688 = vcmask 8192
        %v689 = vsel %vm688, %v684, -inf
        %690 = vmax.xlane.f32.xlu0 %v689
        %v691 = vpop.xlane.xlu0 %690
        %v692 = vsel %vm688, %v685, -inf
        %693 = vmax.xlane.f32.xlu0 %v692
        %v694 = vpop.xlane.xlu0 %693
        %v695 = vsel %vm688, %v686, -inf
        %696 = vmax.xlane.f32.xlu0 %v695
        %v697 = vpop.xlane.xlu0 %696
        %v698 = vsel %vm688, %v687, -inf
        %699 = vmax.xlane.f32.xlu0 %v698
        %v700 = vpop.xlane.xlu0 %699
        %vm701 = vcmask 24592
        %v702 = vsel %vm701, %v684, -inf
        %703 = vmax.xlane.f32.xlu0 %v702
        %v704 = vpop.xlane.xlu0 %703
        %v705 = vsel %vm701, %v685, -inf
        %706 = vmax.xlane.f32.xlu0 %v705
        %v707 = vpop.xlane.xlu0 %706
        %v708 = vsel %vm701, %v686, -inf
        %709 = vmax.xlane.f32.xlu0 %v708
        %v710 = vpop.xlane.xlu0 %709
        %v711 = vsel %vm701, %v687, -inf
        %712 = vmax.xlane.f32.xlu0 %v711
        %v713 = vpop.xlane.xlu0 %712
        %v714 = vsel %vm337, %v691, %v704
        %v715 = vsel %vm337, %v694, %v707
        %v716 = vsel %vm337, %v697, %v710
        %v717 = vsel %vm337, %v700, %v713
        %vm718 = vcmask 10242
        %v719 = vsel %vm718, %v684, -inf
        %720 = vmax.xlane.f32.xlu0 %v719
        %v721 = vpop.xlane.xlu0 %720
        %v722 = vsel %vm718, %v685, -inf
        %723 = vmax.xlane.f32.xlu0 %v722
        %v724 = vpop.xlane.xlu0 %723
        %v725 = vsel %vm718, %v686, -inf
        %726 = vmax.xlane.f32.xlu0 %v725
        %v727 = vpop.xlane.xlu0 %726
        %v728 = vsel %vm718, %v687, -inf
        %729 = vmax.xlane.f32.xlu0 %v728
        %v730 = vpop.xlane.xlu0 %729
        %vm731 = vcmask 26642
        %v732 = vsel %vm731, %v684, -inf
        %733 = vmax.xlane.f32.xlu0 %v732
        %v734 = vpop.xlane.xlu0 %733
        %v735 = vsel %vm731, %v685, -inf
        %736 = vmax.xlane.f32.xlu0 %v735
        %v737 = vpop.xlane.xlu0 %736
        %v738 = vsel %vm731, %v686, -inf
        %739 = vmax.xlane.f32.xlu0 %v738
        %v740 = vpop.xlane.xlu0 %739
        %v741 = vsel %vm731, %v687, -inf
        %742 = vmax.xlane.f32.xlu0 %v741
        %v743 = vpop.xlane.xlu0 %742
        %v744 = vsel %vm337, %v721, %v734
        %v745 = vsel %vm337, %v724, %v737
        %v746 = vsel %vm337, %v727, %v740
        %v747 = vsel %vm337, %v730, %v743
        %v752 = vrot.slane %v744, 1
        %v753 = vrot.slane %v745, 1
        %v754 = vrot.slane %v746, 1
        %v755 = vrot.slane %v747, 1
        %v760 = vsel %vm652, %v714, %v752
        %v761 = vsel %vm652, %v715, %v753
        %v762 = vsel %vm652, %v716, %v754
        %v763 = vsel %vm652, %v717, %v755
        %vm764 = vcmask 9216
        %765 = vst.msk [vmem:[%s254] sm:$0x3] %vm764, %v760
        %766 = vst.msk [vmem:[%s254 + $0x2] sm:$0x3] %vm764, %v761
        %767 = vst.msk [vmem:[%s254 + $0x4] sm:$0x3] %vm764, %v762
        %768 = vst.msk [vmem:[%s254 + $0x6] sm:$0x3] %vm764, %v763
        %v769 = vrot.slane %v663, 2
        %v770 = vrot.slane %v664, 2
        %v771 = vrot.slane %v665, 2
        %v772 = vrot.slane %v666, 2
        %v777 = vmax.f32 %v684, %v769
        %v778 = vmax.f32 %v685, %v770
        %v779 = vmax.f32 %v686, %v771
        %v780 = vmax.f32 %v687, %v772
        %v781 = vrot.slane %v663, 3
        %v782 = vrot.slane %v664, 3
        %v783 = vrot.slane %v665, 3
        %v784 = vrot.slane %v666, 3
        %v789 = vmax.f32 %v777, %v781
        %v790 = vmax.f32 %v778, %v782
        %v791 = vmax.f32 %v779, %v783
        %v792 = vmax.f32 %v780, %v784
        %v793 = vsel %vm285, %v789, -inf
        %794 = vmax.xlane.f32.xlu0 %v793
        %v795 = vpop.xlane.xlu0 %794
        %v796 = vsel %vm285, %v790, -inf
        %797 = vmax.xlane.f32.xlu0 %v796
        %v798 = vpop.xlane.xlu0 %797
        %v799 = vsel %vm285, %v791, -inf
        %800 = vmax.xlane.f32.xlu0 %v799
        %v801 = vpop.xlane.xlu0 %800
        %v802 = vsel %vm285, %v792, -inf
        %803 = vmax.xlane.f32.xlu0 %v802
        %v804 = vpop.xlane.xlu0 %803
        %vm805 = vcmask 0
        %806 = vst.msk [vmem:[%s244] sm:$0x1] %vm805, %v795
        %807 = vst.msk [vmem:[%s244 + $0x1] sm:$0x1] %vm805, %v798
        %808 = vst.msk [vmem:[%s244 + $0x2] sm:$0x1] %vm805, %v801
        %809 = vst.msk [vmem:[%s244 + $0x3] sm:$0x1] %vm805, %v804
        %s810 = smul.u32 4, %s26
        %p811 = scmp.lt.s32.totalorder %s25, 1
        %s812 = scalar_select %p811, %s25, 1
        %p813 = scmp.lt.s32.totalorder %s810, 3
        %s814 = scalar_select %p813, %s810, 3
        %s815 = smul.addr %s812, 4
        %s816 = sadd.s32 %s814, %s815
        %s817 = scalar_lea.vmem %s1, %s816
        %s818 = smul.u32 4, %s26
        %p819 = scmp.lt.s32.totalorder %s25, 1
        %s820 = scalar_select %p819, %s25, 1
        %p821 = scmp.lt.s32.totalorder %s818, 3
        %s822 = scalar_select %p821, %s818, 3
        %s823 = smul.addr %s820, 4
        %s824 = sadd.s32 %s822, %s823
        %s825 = smul.addr %s824, 2
        %s826 = scalar_lea.vmem %s2, %s825
        %s827 = sand.u32 %s127, 1
        %s828 = scalar_lea.sflag [#allocation4], %s827
        %s829 = sand.u32 %s127, 1
        %s830 = smul.addr %s829, 16
        %s831 = scalar_lea.vmem [#allocation5], %s830
        // Predicated region
        $region29: #{tpu_custom_call.1} parent=23 // pred_check
          %p832 = pneg %p81
        $region30: #{tpu_custom_call.1} parent=23 // pred_check_branch
          %834 = sbr.rel (%p832) target = $region32
        $region31: #{tpu_custom_call.1} parent=23 // pred_region
          %s835 = smul.u32 4, %s26
        $region32: #{tpu_custom_call.1} parent=23 // pred_fallthru
          _
        // Predicated region
        $region33: #{tpu_custom_call.1} parent=23 // pred_check
          %p836 = pneg %p109
        $region34: #{tpu_custom_call.1} parent=23 // pred_check_branch
          %838 = sbr.rel (%p836) target = $region36
        $region35: #{tpu_custom_call.1} parent=23 // pred_region
          %s839 = smul.u32 4, %s26
        $region36: #{tpu_custom_call.1} parent=23 // pred_fallthru
          _
        // Predicated region
        $region37: #{tpu_custom_call.1} parent=23 // pred_check
          %p840 = pneg %p137
        $region38: #{tpu_custom_call.1} parent=23 // pred_check_branch
          %842 = sbr.rel (%p840) target = $region40
        $region39: #{tpu_custom_call.1} parent=23 // pred_region
          %s843 = smul.u32 4, %s26
          %845 = vsyncadd %s828, 0
          %s846 = smul.addr %s25, 4
          %s847 = sadd.s32 %s843, %s846
          %s848 = smul.addr %s847, 4
          %s849 = scalar_lea.hbm %s3, %s848
          %s850 = sshll.u32 %s831, 4
          %s851 = int_to_ptr.vmem [resolvable:$true] %s850
          %s852 = sshll.u32 %s849, 4
          %s853 = int_to_ptr.hbm [resolvable:$true] %s852
          %858 = dma.vmem_to_hbm [thread:$0]  %s851, 256, %s853, %s828, 64, 64, 4
        $region40: #{tpu_custom_call.1} parent=23 // pred_fallthru
          _
      $region24: #{tpu_custom_call.1} parent=5 // pred_fallthru
        _
      %p859 = scmp.le.s32.totalorder 2, %s16
      // Predicated region
      $region41: #{tpu_custom_call.1} parent=5 // pred_check
        %p860 = pneg %p859
      $region42: #{tpu_custom_call.1} parent=5 // pred_check_branch
        %862 = sbr.rel (%p860) target = $region44
      $region43: #{tpu_custom_call.1} parent=5 // pred_region
        %s863 = ssub.s32 %s16, 2
        // Predicated region
        $region45: #{tpu_custom_call.1} parent=43 // pred_check
          %p864 = pneg %p87
        $region46: #{tpu_custom_call.1} parent=43 // pred_check_branch
          %866 = sbr.rel (%p864) target = $region48
        $region47: #{tpu_custom_call.1} parent=43 // pred_region
          %s867 = smul.u32 4, %s28
          %p868 = scmp.lt.s32.totalorder %s27, 1
          %s869 = scalar_select %p868, %s27, 1
          %p870 = scmp.lt.s32.totalorder %s867, 3
          %s871 = scalar_select %p870, %s867, 3
          %s872 = smul.addr %s869, 4
          %s873 = sadd.s32 %s871, %s872
          %s874 = scalar_lea.vmem %s1, %s873
        $region48: #{tpu_custom_call.1} parent=43 // pred_fallthru
          _
        // Predicated region
        $region49: #{tpu_custom_call.1} parent=43 // pred_check
          %p875 = pneg %p115
        $region50: #{tpu_custom_call.1} parent=43 // pred_check_branch
          %877 = sbr.rel (%p875) target = $region52
        $region51: #{tpu_custom_call.1} parent=43 // pred_region
          %s878 = smul.u32 4, %s28
          %p879 = scmp.lt.s32.totalorder %s27, 1
          %s880 = scalar_select %p879, %s27, 1
          %p881 = scmp.lt.s32.totalorder %s878, 3
          %s882 = scalar_select %p881, %s878, 3
          %s883 = smul.addr %s880, 4
          %s884 = sadd.s32 %s882, %s883
          %s885 = smul.addr %s884, 2
          %s886 = scalar_lea.vmem %s2, %s885
        $region52: #{tpu_custom_call.1} parent=43 // pred_fallthru
          _
        // Predicated region
        $region53: #{tpu_custom_call.1} parent=43 // pred_check
          %p887 = pneg %p143
        $region54: #{tpu_custom_call.1} parent=43 // pred_check_branch
          %889 = sbr.rel (%p887) target = $region56
        $region55: #{tpu_custom_call.1} parent=43 // pred_region
          %s890 = sand.u32 %s128, 1
          %s891 = scalar_lea.sflag [#allocation4], %s890
          %s892 = sand.u32 %s128, 1
          %s893 = smul.addr %s892, 16
          %s894 = scalar_lea.vmem [#allocation5], %s893
          %896 = dma.done %s891, 256
        $region56: #{tpu_custom_call.1} parent=43 // pred_fallthru
          _
      $region44: #{tpu_custom_call.1} parent=5 // pred_fallthru
        _
    $region6: #{tpu_custom_call.1} parent=1 // loop_footer
      %s20 = sadd.s32 1, %s16
    $region7: #{tpu_custom_call.1} parent=1 // loop_footer_branch
      %15 = sbr.rel target = $region3
    $region8: #{tpu_custom_call.1} parent=1 // loop_exit
      _
    %897 = vsyncpa [#allocation3], 1
    %s898 = scalar_lea.sflag [#allocation3], 1
    %899 = vsyncpa %s898, 1
    %900 = vsyncpa [#allocation4], 1
    %s901 = scalar_lea.sflag [#allocation4], 1
    %902 = vsyncpa %s901, 1

</llo_original>
